<compile_context>
chip_gen: v7x
topology: tpu7x:2x2x1
jax: 0.10.0
libtpu: 0.0.40
codegen_flags: <defaults>
</compile_context>

<pallas_src>
import math

import jax
import jax.numpy as jnp
from jax.experimental import pallas as pl
from jax.experimental.pallas import tpu as pltpu


_ROWS_PER_PACKED_ROW = 8      # f32 sublanes folded into the lane dimension
_PACKED_TILE_ROWS = 256       # 256 packed rows == 2048 original rows per grid step
                              # x tile 256x256 f32 = 256 KiB, out tile 128 KiB
                              # -> ~0.9 MiB double-buffered incl. resident weight;
                              # safe under v7x's 32 MiB scoped VMEM default.


def _linear_kernel(x_ref, w_ref, b_ref, o_ref):
    # x_ref: (TILE, 8K)  w_ref: (8K, 8N)  b_ref: (1, 8N)  o_ref: (TILE, 8N)
    acc = jnp.dot(x_ref[...], w_ref[...], preferred_element_type=jnp.float32)
    o_ref[...] = (acc + b_ref[...]).astype(o_ref.dtype)   # one VPU add per tile


def duration_regression_forward(x, weight, bias):
    """y = x @ weight.T + bias   (PyTorch nn.Linear semantics).

    x: (..., input_size) float32
    weight: (num_features, input_size)   (PyTorch layout)
    bias:   (num_features,)
    """
    out_size, in_size = weight.shape
    lead_shape = x.shape[:-1]
    m = math.prod(lead_shape) if lead_shape else 1

    s = _ROWS_PER_PACKED_ROW
    mp = ((m + s - 1) // s) * s                     # rows padded to a multiple of 8

    x2d = x.reshape(m, in_size)
    if mp != m:
        x2d = jnp.pad(x2d, ((0, mp - m), (0, 0)))   # zero-pad tail rows
    x_packed = x2d.reshape(mp // s, s * in_size)    # row-major => free bit-identical view

    # Block-diagonal weight so 8 independent rows are computed per packed row.
    w_big = jnp.kron(jnp.eye(s, dtype=weight.dtype), weight.T)      # (8K, 8N)
    b_big = jnp.tile(bias, s).reshape(1, s * out_size)              # (1, 8N)

    m2 = mp // s
    k_big = s * in_size
    n_big = s * out_size
    tile_m2 = min(_PACKED_TILE_ROWS, m2)            # full-extent block if tiny
    grid = (pl.cdiv(m2, tile_m2),)                  # partial last block handled by Pallas

    out = pl.pallas_call(
        _linear_kernel,
        out_shape=jax.ShapeDtypeStruct((m2, n_big), x.dtype),
        grid=grid,
        in_specs=[
            pl.BlockSpec((tile_m2, k_big), lambda i: (i, 0)),   # streamed x tiles
            pl.BlockSpec((k_big, n_big), lambda i: (0, 0)),     # resident weight
            pl.BlockSpec((1, n_big), lambda i: (0, 0)),         # resident bias
        ],
        out_specs=pl.BlockSpec((tile_m2, n_big), lambda i: (i, 0)),
        compiler_params=pltpu.CompilerParams(
            dimension_semantics=("parallel",),       # lets v7x shard M over both TCs
        ),
    )(x_packed, w_big, b_big)

    out = out.reshape(mp, out_size)[:m]             # undo lane packing + row padding (free)
    return out.reshape(*lead_shape, out_size)


if __name__ == "__main__":
    # Module config: DurationRegression(input_size=32, num_features=16)
    input_size = 32
    num_features = 16
    batch, seq = 2, 8

    key = jax.random.PRNGKey(0)
    kx, kw, kb, kx2 = jax.random.split(key, 4)

    # Deterministic parameter init mirroring nn.Linear defaults
    # (uniform in [-1/sqrt(in), 1/sqrt(in)]).
    bound = 1.0 / math.sqrt(input_size)
    weight = jax.random.uniform(
        kw, (num_features, input_size), jnp.float32, -bound, bound)
    bias = jax.random.uniform(
        kb, (num_features,), jnp.float32, -bound, bound)

    # Small-shape check (matches the module's toy config).
    x = jax.random.normal(kx, (batch, seq, input_size), jnp.float32)
    y = duration_regression_forward(x, weight, bias)
    y = jax.block_until_ready(y)
    y_ref = x @ weight.T + bias
    assert y.shape == (batch, seq, num_features)
    assert jnp.allclose(y, y_ref, atol=1e-5, rtol=1e-5)

    # Larger check exercising the M grid, partial last block and row padding
    # (batch*seq = 2404 -> pads to 2408 rows, grid of 2 tiles).
    x_big = jax.random.normal(kx2, (4, 601, input_size), jnp.float32)
    y_big = duration_regression_forward(x_big, weight, bias)
    y_big = jax.block_until_ready(y_big)
    y_big_ref = x_big @ weight.T + bias
    assert y_big.shape == (4, 601, num_features)
    assert jnp.allclose(y_big, y_big_ref, atol=1e-5, rtol=1e-5)

    print("KERNEL_OK")
</pallas_src>

<mosaic_0001>
module attributes {stable_mosaic.version = 11 : i64} {
  func.func @_linear_kernel(%arg0: i32, %arg1: memref<2x256xf32, #tpu.memory_space<vmem>>, %arg2: memref<256x128xf32, #tpu.memory_space<vmem>>, %arg3: memref<1x128xf32, #tpu.memory_space<vmem>>, %arg4: memref<2x128xf32, #tpu.memory_space<vmem>>) attributes {dimension_semantics = [#tpu.dimension_semantics<parallel>], iteration_bounds = array<i64: 1>, scalar_prefetch = 0 : i64, scratch_operands = 0 : i64, tpu.core_type = #tpu.core_type<tc>, window_params = [{transform_indices = @transform_0, window_bounds = array<i64: 2, 256>}, {pipeline_mode = #tpu.pipeline_mode<synchronous>, transform_indices = @transform_1, window_bounds = array<i64: 256, 128>}, {pipeline_mode = #tpu.pipeline_mode<synchronous>, transform_indices = @transform_2, window_bounds = array<i64: 1, 128>}, {transform_indices = @transform_3, window_bounds = array<i64: 2, 128>}]} {
    %c0 = arith.constant 0 : index
    %c0_0 = arith.constant 0 : index
    %0 = vector.load %arg1[%c0, %c0_0] : memref<2x256xf32, #tpu.memory_space<vmem>>, vector<2x256xf32>
    %c0_1 = arith.constant 0 : index
    %c0_2 = arith.constant 0 : index
    %1 = vector.load %arg2[%c0_1, %c0_2] : memref<256x128xf32, #tpu.memory_space<vmem>>, vector<256x128xf32>
    %cst = arith.constant dense<0.000000e+00> : vector<2x128xf32>
    %2 = tpu.matmul %0, %1, %cst {dimension_numbers = #tpu.dot_dimension_numbers<[1], [0], [0], [1], [0, 0, 1, 1], [], []>} : vector<2x256xf32>, vector<256x128xf32>, vector<2x128xf32> -> vector<2x128xf32>
    %c0_3 = arith.constant 0 : index
    %c0_4 = arith.constant 0 : index
    %3 = vector.load %arg3[%c0_3, %c0_4] : memref<1x128xf32, #tpu.memory_space<vmem>>, vector<1x128xf32>
    %4 = vector.broadcast %3 : vector<1x128xf32> to vector<2x128xf32>
    %5 = arith.addf %2, %4 : vector<2x128xf32>
    %c0_5 = arith.constant 0 : index
    %c0_6 = arith.constant 0 : index
    %6 = vector.load %arg4[%c0_5, %c0_6] : memref<2x128xf32, #tpu.memory_space<vmem>>, vector<2x128xf32>
    tpu.vector_store %arg4[%c0_5, %c0_6], %5 {strides = array<i32>} : memref<2x128xf32, #tpu.memory_space<vmem>>, vector<2x128xf32>,
    return
  }
  func.func @transform_0(%arg0: i32) -> (i32, i32) {
    %c0_i32 = arith.constant 0 : i32
    %c0_i32_0 = arith.constant 0 : i32
    return %arg0, %c0_i32 : i32, i32
  }
  func.func @transform_1(%arg0: i32) -> (i32, i32) {
    %c0_i32 = arith.constant 0 : i32
    %c0_i32_0 = arith.constant 0 : i32
    %c0_i32_1 = arith.constant 0 : i32
    return %c0_i32, %c0_i32_0 : i32, i32
  }
  func.func @transform_2(%arg0: i32) -> (i32, i32) {
    %c0_i32 = arith.constant 0 : i32
    %c0_i32_0 = arith.constant 0 : i32
    %c0_i32_1 = arith.constant 0 : i32
    return %c0_i32, %c0_i32_0 : i32, i32
  }
  func.func @transform_3(%arg0: i32) -> (i32, i32) {
    %c0_i32 = arith.constant 0 : i32
    %c0_i32_0 = arith.constant 0 : i32
    return %arg0, %c0_i32 : i32, i32
  }
}

</mosaic_0001>

<llo_original>
// kernel: tpu_custom_call.1
$region0: #{tpu_custom_call.1}
  #allocation0 [shape = 'u32[]', space=smem, size = 0x4, offset = 0x4, fixed_abs, tag = 'smem constant byte address 0x4 - core index']
  #allocation1 [shape = 'u32[144,128]{1,0:T(1,128)}', space=vmem, size = 0x12000, scoped, tag = 'internal scratch']
  %s0 = inlined_call_operand.hbm [shape: f32[2,256], index: 0, kind: input, shape index: {}]
  %s1 = inlined_call_operand.hbm [shape: f32[256,128], index: 1, kind: input, shape index: {}]
  %s2 = inlined_call_operand.vmem [shape: f32[1,128], index: 2, kind: input, shape index: {}]
  %s3 = inlined_call_operand.hbm [shape: f32[2,128], index: 3, kind: output, shape index: {}]
  %s4 = sld [smem:[#allocation0]]
  $region30: #{tpu_custom_call.1} parent=0
    _
  %s6 = ssub.s32 1, %s4
  %s7 = scalar_select 0, %s6, %s4
  $region1: #{tpu_custom_call.1} parent=0
    #allocation2 [shape = 'u8[2048]{0}', space=vmem, size = 0x800, scoped, tag = 'input window, operand 0, single buffered']
    #allocation3 [shape = 's32[1]{0}', space=sflag, size = 0x4, scoped, tag = 'scoped memory for tpu_custom_call.1']
    #allocation4 [shape = 's32[1]{0}', space=sflag, size = 0x4, scoped, tag = 'scoped memory for tpu_custom_call.1']
    #allocation5 [shape = 'u8[131072]{0}', space=vmem, size = 0x20000, scoped, tag = 'input window, operand 1, single buffered']
    #allocation6 [shape = 's32[1]{0}', space=sflag, size = 0x4, scoped, tag = 'scoped memory for tpu_custom_call.1']
    #allocation7 [shape = 'u8[1024]{0}', space=vmem, size = 0x400, scoped, tag = 'output window, operand 0, single buffered']
    %8 = vsyncpa [#allocation3], 0
    %9 = vsyncpa [#allocation6], 0
    %10 = vsyncpa [#allocation4], 0
    // Predicated region
    $region2: #{tpu_custom_call.1} parent=1 // pred_check
      _
    $region3: #{tpu_custom_call.1} parent=1 // pred_check_branch
      %12 = sbr.rel (0) target = $region5
    $region4: #{tpu_custom_call.1} parent=1 // pred_region
      %s14 = ssub.s32 64, 64
      %15 = vsyncadd [#allocation3], %s14
      %s17 = sshll.u32 [#allocation2], 4
      %s18 = int_to_ptr.vmem [resolvable:$true] %s17
      %20 = dma.hbm_to_vmem [thread:$0]  %s0, 64, %s18, [#allocation3]
    $region5: #{tpu_custom_call.1} parent=1 // pred_fallthru
      _
    // Predicated region
    $region6: #{tpu_custom_call.1} parent=1 // pred_check
      _
    $region7: #{tpu_custom_call.1} parent=1 // pred_check_branch
      %22 = sbr.rel (0) target = $region9
    $region8: #{tpu_custom_call.1} parent=1 // pred_region
      %s24 = ssub.s32 4096, 4096
      %25 = vsyncadd [#allocation6], %s24
      %s26 = sshll.u32 [#allocation5], 4
      %s27 = int_to_ptr.vmem [resolvable:$true] %s26
      %32 = dma.hbm_to_vmem [thread:$0]  %s1, 4096, %s27, [#allocation6], 128, 128, 8
    $region9: #{tpu_custom_call.1} parent=1 // pred_fallthru
      _
    // Predicated region
    $region10: #{tpu_custom_call.1} parent=1 // pred_check
      _
    $region11: #{tpu_custom_call.1} parent=1 // pred_check_branch
      %34 = sbr.rel (0) target = $region13
    $region12: #{tpu_custom_call.1} parent=1 // pred_region
      _
    $region13: #{tpu_custom_call.1} parent=1 // pred_fallthru
      _
    // Predicated region
    $region14: #{tpu_custom_call.1} parent=1 // pred_check
      _
    $region15: #{tpu_custom_call.1} parent=1 // pred_check_branch
      %36 = sbr.rel (0) target = $region17
    $region16: #{tpu_custom_call.1} parent=1 // pred_region
      %37 = dma.done [#allocation3], 64
    $region17: #{tpu_custom_call.1} parent=1 // pred_fallthru
      _
    // Predicated region
    $region18: #{tpu_custom_call.1} parent=1 // pred_check
      _
    $region19: #{tpu_custom_call.1} parent=1 // pred_check_branch
      %39 = sbr.rel (0) target = $region21
    $region20: #{tpu_custom_call.1} parent=1 // pred_region
      %40 = dma.done [#allocation6], 4096
    $region21: #{tpu_custom_call.1} parent=1 // pred_fallthru
      _
    %v41 = vld [vmem:[#allocation2] sm:$0xf]
    %v42 = vld [vmem:[#allocation5] sm:$0xff]
    %v43 = vld [vmem:[#allocation5 + $0x8] sm:$0xff]
    %v44 = vld [vmem:[#allocation5 + $0x10] sm:$0xff]
    %v45 = vld [vmem:[#allocation5 + $0x18] sm:$0xff]
    %v46 = vld [vmem:[#allocation5 + $0x20] sm:$0xff]
    %v47 = vld [vmem:[#allocation5 + $0x28] sm:$0xff]
    %v48 = vld [vmem:[#allocation5 + $0x30] sm:$0xff]
    %v49 = vld [vmem:[#allocation5 + $0x38] sm:$0xff]
    %v50 = vld [vmem:[#allocation5 + $0x40] sm:$0xff]
    %v51 = vld [vmem:[#allocation5 + $0x48] sm:$0xff]
    %v52 = vld [vmem:[#allocation5 + $0x50] sm:$0xff]
    %v53 = vld [vmem:[#allocation5 + $0x58] sm:$0xff]
    %v54 = vld [vmem:[#allocation5 + $0x60] sm:$0xff]
    %v55 = vld [vmem:[#allocation5 + $0x68] sm:$0xff]
    %v56 = vld [vmem:[#allocation5 + $0x70] sm:$0xff]
    %v57 = vld [vmem:[#allocation5 + $0x78] sm:$0xff]
    %v58 = vld [vmem:[#allocation5 + $0x80] sm:$0xff]
    %v59 = vld [vmem:[#allocation5 + $0x88] sm:$0xff]
    %v60 = vld [vmem:[#allocation5 + $0x90] sm:$0xff]
    %v61 = vld [vmem:[#allocation5 + $0x98] sm:$0xff]
    %v62 = vld [vmem:[#allocation5 + $0xa0] sm:$0xff]
    %v63 = vld [vmem:[#allocation5 + $0xa8] sm:$0xff]
    %v64 = vld [vmem:[#allocation5 + $0xb0] sm:$0xff]
    %v65 = vld [vmem:[#allocation5 + $0xb8] sm:$0xff]
    %v66 = vld [vmem:[#allocation5 + $0xc0] sm:$0xff]
    %v67 = vld [vmem:[#allocation5 + $0xc8] sm:$0xff]
    %v68 = vld [vmem:[#allocation5 + $0xd0] sm:$0xff]
    %v69 = vld [vmem:[#allocation5 + $0xd8] sm:$0xff]
    %v70 = vld [vmem:[#allocation5 + $0xe0] sm:$0xff]
    %v71 = vld [vmem:[#allocation5 + $0xe8] sm:$0xff]
    %v72 = vld [vmem:[#allocation5 + $0xf0] sm:$0xff]
    %v73 = vld [vmem:[#allocation5 + $0xf8] sm:$0xff]
    %v74 = vld [vmem:[%s2] sm:$0x1]
    %v76 = vlaneseq
    %v77 = vshrl.u32 %v76, 7
    %v78 = vsub.s32 0, %v77
    %v79 = vrot.slane %v74, %v78
    %v83 = vunpack.c.l.s4 1983009808
    %v84 = vunpack.c.0.s8 %v83
    %v85 = vlaneseq
    %v86 = vshrl.u32 %v85, 7
    %v87 = vsub.s32 %v84, %v86
    %v88 = vrot.slane %v41, %v87
    %v89 = vcombine.high %v88, %v88
    %92 = vmatprep.subr.mxu0 0.0
    %93 = vmatpush1.msra.mxu0 %v42
    %94 = vmatprep.subr.mxu0 0.0
    %95 = vmatpush1.msra.mxu0 %v43
    %96 = vmatprep.subr.mxu0 0.0
    %97 = vmatpush1.msra.mxu0 %v44
    %98 = vmatprep.subr.mxu0 0.0
    %99 = vmatpush1.msra.mxu0 %v45
    %100 = vmatprep.subr.mxu0 0.0
    %101 = vmatpush1.msra.mxu0 %v46
    %102 = vmatprep.subr.mxu0 0.0
    %103 = vmatpush1.msra.mxu0 %v47
    %104 = vmatprep.subr.mxu0 0.0
    %105 = vmatpush1.msra.mxu0 %v48
    %106 = vmatprep.subr.mxu0 0.0
    %107 = vmatpush1.msra.mxu0 %v49
    %108 = vmatprep.subr.mxu0 0.0
    %109 = vmatpush1.msra.mxu0 %v50
    %110 = vmatprep.subr.mxu0 0.0
    %111 = vmatpush1.msra.mxu0 %v51
    %112 = vmatprep.subr.mxu0 0.0
    %113 = vmatpush1.msra.mxu0 %v52
    %114 = vmatprep.subr.mxu0 0.0
    %115 = vmatpush1.msra.mxu0 %v53
    %116 = vmatprep.subr.mxu0 0.0
    %117 = vmatpush1.msra.mxu0 %v54
    %118 = vmatprep.subr.mxu0 0.0
    %119 = vmatpush1.msra.mxu0 %v55
    %120 = vmatprep.subr.mxu0 0.0
    %121 = vmatpush1.msra.mxu0 %v56
    %122 = vmatprep.subr.mxu0 0.0
    %123 = vmatpush1.msra.mxu0 %v57
    %124 = vmatprep.subr.mxu0 0.0
    %125 = vmatpush1.msra.mxu0 %v58
    %126 = vmatprep.subr.mxu0 0.0
    %127 = vmatpush1.msra.mxu0 %v59
    %128 = vmatprep.subr.mxu0 0.0
    %129 = vmatpush1.msra.mxu0 %v60
    %130 = vmatprep.subr.mxu0 0.0
    %131 = vmatpush1.msra.mxu0 %v61
    %132 = vmatprep.subr.mxu0 0.0
    %133 = vmatpush1.msra.mxu0 %v62
    %134 = vmatprep.subr.mxu0 0.0
    %135 = vmatpush1.msra.mxu0 %v63
    %136 = vmatprep.subr.mxu0 0.0
    %137 = vmatpush1.msra.mxu0 %v64
    %138 = vmatprep.subr.mxu0 0.0
    %139 = vmatpush1.msra.mxu0 %v65
    %140 = vmatprep.subr.mxu0 0.0
    %141 = vmatpush1.msra.mxu0 %v66
    %142 = vmatprep.subr.mxu0 0.0
    %143 = vmatpush1.msra.mxu0 %v67
    %144 = vmatprep.subr.mxu0 0.0
    %145 = vmatpush1.msra.mxu0 %v68
    %146 = vmatprep.subr.mxu0 0.0
    %147 = vmatpush1.msra.mxu0 %v69
    %148 = vmatprep.subr.mxu0 0.0
    %149 = vmatpush1.msra.mxu0 %v70
    %150 = vmatprep.subr.mxu0 0.0
    %151 = vmatpush1.msra.mxu0 %v71
    %152 = vmatprep.subr.mxu0 0.0
    %153 = vmatpush1.msra.mxu0 %v72
    %154 = vmatprep.subr.mxu0 0.0
    %155 = vmatpush1.msra.mxu0 %v73
    %156 = vmatprep.mubr.f32.mxu0 %v89
    %157 = vmatmul.mubr.f32.gmra.mrb[0].mxu0 %v88
    %v158 = vpop.f32.mrb[0].mxu0
    %v159 = vadd.f32 %v79, %v158
    %v160 = vpop.f32.mrb[0].mxu0
    %161 = vdwg.mxu0
    %162 = vst [vmem:[#allocation7] sm:$0x3] %v159
    // Predicated region
    $region22: #{tpu_custom_call.1} parent=1 // pred_check
      _
    $region23: #{tpu_custom_call.1} parent=1 // pred_check_branch
      %164 = sbr.rel (0) target = $region25
    $region24: #{tpu_custom_call.1} parent=1 // pred_region
      %s166 = ssub.s32 32, 32
      %167 = vsyncadd [#allocation4], %s166
      %s169 = sshll.u32 [#allocation7], 4
      %s170 = int_to_ptr.vmem [resolvable:$true] %s169
      %172 = dma.vmem_to_hbm [thread:$0]  %s170, 32, %s3, [#allocation4]
    $region25: #{tpu_custom_call.1} parent=1 // pred_fallthru
      _
    // Predicated region
    $region26: #{tpu_custom_call.1} parent=1 // pred_check
      _
    $region27: #{tpu_custom_call.1} parent=1 // pred_check_branch
      %174 = sbr.rel (0) target = $region29
    $region28: #{tpu_custom_call.1} parent=1 // pred_region
      %175 = dma.done [#allocation4], 32
    $region29: #{tpu_custom_call.1} parent=1 // pred_fallthru
      _
    %176 = vsyncpa [#allocation3], 1
    %177 = vsyncpa [#allocation6], 1
    %178 = vsyncpa [#allocation4], 1

</llo_original>
